<compile_context>
chip_gen: v7x
topology: tpu7x:2x2x1
jax: 0.10.0
libtpu: 0.0.40
codegen_flags: <defaults>
</compile_context>

<pallas_src>
import jax
import jax.numpy as jnp
from jax.experimental import pallas as pl
from jax.experimental.pallas import tpu as pltpu


def dueling_head_kernel(h_ref, w_ref, b_ref, s_ref, st_ref, out_ref):
    """Fused distributional dueling head.

    h_ref  : (TILE_B, in_size)                    f32
    w_ref  : (in_size, n_actions*n_atoms)         f32  fused (centered adv | tiled value)
    b_ref  : (1, n_actions*n_atoms)               f32  fused bias
    s_ref  : (n_actions*n_atoms, n_actions)       f32  one-hot column->action matrix
    st_ref : (n_actions, n_actions*n_atoms)       f32  its transpose
    out_ref: (TILE_B, n_actions*n_atoms)          f32  softmax probs (per action segment)
    """
    # Single MXU matmul: (TILE_B, in_size) @ (in_size, A*Z) + bias.
    logits = jnp.dot(h_ref[...], w_ref[...],
                     preferred_element_type=jnp.float32) + b_ref[...]

    # Softmax over each n_atoms-wide action segment.
    # A row-global max is a mathematically exact shift for every segment's softmax
    # (the common factor cancels); one XLU reduction instead of n_actions small ones.
    m = jnp.max(logits, axis=-1, keepdims=True)              # (TILE_B, 1)
    e = jnp.exp(logits - m)                                   # (TILE_B, A*Z)  (EUP)

    # Per-action sums via one-hot matmul (MXU), reciprocal (EUP), broadcast back (MXU).
    seg_sum = jnp.dot(e, s_ref[...], preferred_element_type=jnp.float32)   # (TILE_B, A)
    inv = pl.reciprocal(seg_sum, approx=False)                             # exact 1/x
    inv_full = jnp.dot(inv, st_ref[...], preferred_element_type=jnp.float32)

    # Single lane-dense store.
    out_ref[...] = e * inv_full


def prepare_fused_params(wa, ba, wv, bv, *, n_actions, n_atoms, in_size):
    """One-time parameter re-layout (hoisted out of the forward path).

    wa : (n_actions*n_atoms, in_size//2)  PyTorch nn.Linear weight layout
    ba : (n_actions*n_atoms,)
    wv : (n_atoms, in_size//2)
    bv : (n_atoms,)
    """
    half = in_size // 2
    n_cols = n_actions * n_atoms

    wa3 = wa.reshape(n_actions, n_atoms, half)
    ba2 = ba.reshape(n_actions, n_atoms)

    # Fold the dueling "subtract mean over actions" into the parameters (linear op).
    wa3c = wa3 - jnp.mean(wa3, axis=0, keepdims=True)
    ba2c = ba2 - jnp.mean(ba2, axis=0, keepdims=True)

    # Rows [0, half): centered advantage weights; column a*n_atoms+z <- wa3c[a, z, :].
    w_adv = jnp.transpose(wa3c, (2, 0, 1)).reshape(half, n_cols)
    # Rows [half, in_size): value weights, replicated for every action segment.
    w_val = jnp.tile(wv.T, (1, n_actions))                     # (half, n_cols)
    w_fused = jnp.concatenate([w_adv, w_val], axis=0)          # (in_size, n_cols)
    b_fused = (ba2c + bv[None, :]).reshape(1, n_cols)          # (1, n_cols)

    # One-hot segment matrices for the per-action softmax denominator.
    col_seg = jnp.arange(n_cols, dtype=jnp.int32) // n_atoms
    seg_onehot = (col_seg[:, None] == jnp.arange(n_actions, dtype=jnp.int32)[None, :]
                  ).astype(jnp.float32)                        # (n_cols, n_actions)
    seg_onehot_t = seg_onehot.T                                # (n_actions, n_cols)

    return w_fused, b_fused, seg_onehot, seg_onehot_t


def _pick_tile_b(batch, target=256):
    """Largest multiple-of-8 tile <= target that divides batch; else whole batch."""
    if batch <= target:
        return batch
    t = (target // 8) * 8
    while t >= 8:
        if batch % t == 0:
            return t
        t -= 8
    return batch


def distributional_dueling_head(h, fused_params, *, n_actions, n_atoms, v_min, v_max):
    """Forward pass: returns (probs, z_values)."""
    w_fused, b_fused, seg_onehot, seg_onehot_t = fused_params
    B, in_size = h.shape
    n_cols = n_actions * n_atoms
    tile_b = _pick_tile_b(B)
    grid = (B // tile_b,)

    # Explicit VMEM budget: double-buffered h/out tiles + resident params + headroom.
    per_iter = 4 * 2 * tile_b * (in_size + n_cols)
    resident = 4 * (in_size * n_cols + n_cols + 2 * n_cols * n_actions)
    vmem_limit = int(min(32 * 1024 * 1024, max(8 * 1024 * 1024, 4 * (per_iter + resident))))

    probs_flat = pl.pallas_call(
        dueling_head_kernel,
        out_shape=jax.ShapeDtypeStruct((B, n_cols), jnp.float32),
        grid=grid,
        in_specs=[
            pl.BlockSpec((tile_b, in_size), lambda i: (i, 0)),     # h: batch-tiled
            pl.BlockSpec((in_size, n_cols), lambda i: (0, 0)),     # fused weights: resident
            pl.BlockSpec((1, n_cols), lambda i: (0, 0)),           # fused bias: resident
            pl.BlockSpec((n_cols, n_actions), lambda i: (0, 0)),   # one-hot: resident
            pl.BlockSpec((n_actions, n_cols), lambda i: (0, 0)),   # one-hot^T: resident
        ],
        out_specs=pl.BlockSpec((tile_b, n_cols), lambda i: (i, 0)),
        compiler_params=pltpu.CompilerParams(
            dimension_semantics=("parallel",),
            vmem_limit_bytes=vmem_limit,
        ),
    )(h, w_fused, b_fused, seg_onehot, seg_onehot_t)

    # Free metadata reshape (no transpose, no HBM roundtrip).
    probs = probs_flat.reshape(B, n_actions, n_atoms)
    z_values = jnp.linspace(v_min, v_max, n_atoms, dtype=jnp.float32)
    return probs, z_values


def _reference(h, wa, ba, wv, bv, *, n_actions, n_atoms):
    """Pure-JAX reference mirroring the PyTorch forward."""
    half = h.shape[1] // 2
    h_a, h_v = h[:, :half], h[:, half:]
    a_logits = (h_a @ wa.T + ba).reshape(-1, n_actions, n_atoms)
    a_logits = a_logits - a_logits.mean(axis=1, keepdims=True)
    v_logits = (h_v @ wv.T + bv).reshape(-1, 1, n_atoms)
    return jax.nn.softmax(a_logits + v_logits, axis=2)


if __name__ == "__main__":
    # Small config consistent with the module: in_size even, distributional atoms.
    B = 2
    in_size = 32
    n_actions = 4
    n_atoms = 51
    v_min, v_max = -10.0, 10.0
    half = in_size // 2

    key = jax.random.PRNGKey(0)
    k_h, k_wa, k_ba, k_wv, k_bv = jax.random.split(key, 5)

    # Deterministic parameter init (PyTorch Linear-style uniform(-1/sqrt(fan_in), +)).
    bound = 1.0 / (half ** 0.5)
    h = jax.random.normal(k_h, (B, in_size), dtype=jnp.float32)
    wa = jax.random.uniform(k_wa, (n_actions * n_atoms, half), jnp.float32, -bound, bound)
    ba = jax.random.uniform(k_ba, (n_actions * n_atoms,), jnp.float32, -bound, bound)
    wv = jax.random.uniform(k_wv, (n_atoms, half), jnp.float32, -bound, bound)
    bv = jax.random.uniform(k_bv, (n_atoms,), jnp.float32, -bound, bound)

    # One-time parameter re-layout, hoisted out of the forward path.
    fused_params = prepare_fused_params(
        wa, ba, wv, bv, n_actions=n_actions, n_atoms=n_atoms, in_size=in_size)
    fused_params = tuple(jax.block_until_ready(p) for p in fused_params)

    probs, z_values = distributional_dueling_head(
        h, fused_params,
        n_actions=n_actions, n_atoms=n_atoms, v_min=v_min, v_max=v_max,
    )
    probs = jax.block_until_ready(probs)
    z_values = jax.block_until_ready(z_values)

    # Sanity check against the pure-JAX reference.
    ref = _reference(h, wa, ba, wv, bv, n_actions=n_actions, n_atoms=n_atoms)
    assert probs.shape == (B, n_actions, n_atoms)
    assert z_values.shape == (n_atoms,)
    assert jnp.allclose(probs, ref, atol=1e-5, rtol=1e-5)
    assert jnp.allclose(jnp.sum(probs, axis=-1), 1.0, atol=1e-5)

    print("KERNEL_OK")
</pallas_src>

<mosaic_0001>
module attributes {stable_mosaic.version = 11 : i64} {
  func.func @dueling_head_kernel(%arg0: i32, %arg1: memref<2x32xf32, #tpu.memory_space<vmem>>, %arg2: memref<32x204xf32, #tpu.memory_space<vmem>>, %arg3: memref<1x204xf32, #tpu.memory_space<vmem>>, %arg4: memref<204x4xf32, #tpu.memory_space<vmem>>, %arg5: memref<4x204xf32, #tpu.memory_space<vmem>>, %arg6: memref<2x204xf32, #tpu.memory_space<vmem>>) attributes {dimension_semantics = [#tpu.dimension_semantics<parallel>], iteration_bounds = array<i64: 1>, scalar_prefetch = 0 : i64, scratch_operands = 0 : i64, tpu.core_type = #tpu.core_type<tc>, window_params = [{transform_indices = @transform_0, window_bounds = array<i64: 2, 32>}, {pipeline_mode = #tpu.pipeline_mode<synchronous>, transform_indices = @transform_1, window_bounds = array<i64: 32, 204>}, {pipeline_mode = #tpu.pipeline_mode<synchronous>, transform_indices = @transform_2, window_bounds = array<i64: 1, 204>}, {pipeline_mode = #tpu.pipeline_mode<synchronous>, transform_indices = @transform_3, window_bounds = array<i64: 204, 4>}, {pipeline_mode = #tpu.pipeline_mode<synchronous>, transform_indices = @transform_4, window_bounds = array<i64: 4, 204>}, {transform_indices = @transform_5, window_bounds = array<i64: 2, 204>}]} {
    %c0 = arith.constant 0 : index
    %c0_0 = arith.constant 0 : index
    %0 = vector.load %arg1[%c0, %c0_0] : memref<2x32xf32, #tpu.memory_space<vmem>>, vector<2x32xf32>
    %c0_1 = arith.constant 0 : index
    %c0_2 = arith.constant 0 : index
    %1 = vector.load %arg2[%c0_1, %c0_2] : memref<32x204xf32, #tpu.memory_space<vmem>>, vector<32x204xf32>
    %cst = arith.constant dense<0.000000e+00> : vector<2x204xf32>
    %2 = tpu.matmul %0, %1, %cst {dimension_numbers = #tpu.dot_dimension_numbers<[1], [0], [0], [1], [0, 0, 1, 1], [], []>} : vector<2x32xf32>, vector<32x204xf32>, vector<2x204xf32> -> vector<2x204xf32>
    %c0_3 = arith.constant 0 : index
    %c0_4 = arith.constant 0 : index
    %3 = vector.load %arg3[%c0_3, %c0_4] : memref<1x204xf32, #tpu.memory_space<vmem>>, vector<1x204xf32>
    %4 = vector.broadcast %3 : vector<1x204xf32> to vector<2x204xf32>
    %5 = arith.addf %2, %4 : vector<2x204xf32>
    %cst_5 = arith.constant dense<0xFF800000> : vector<2xf32>
    %6 = vector.multi_reduction <maximumf>, %5, %cst_5 [1] : vector<2x204xf32> to vector<2xf32>
    %7 = vector.shape_cast %6 : vector<2xf32> to vector<2x1xf32>
    %8 = vector.broadcast %7 : vector<2x1xf32> to vector<2x204xf32>
    %9 = arith.subf %5, %8 : vector<2x204xf32>
    %10 = math.exp %9 : vector<2x204xf32>
    %c0_6 = arith.constant 0 : index
    %c0_7 = arith.constant 0 : index
    %11 = vector.load %arg4[%c0_6, %c0_7] : memref<204x4xf32, #tpu.memory_space<vmem>>, vector<204x4xf32>
    %cst_8 = arith.constant dense<0.000000e+00> : vector<2x4xf32>
    %12 = tpu.matmul %10, %11, %cst_8 {dimension_numbers = #tpu.dot_dimension_numbers<[1], [0], [0], [1], [0, 0, 1, 1], [], []>} : vector<2x204xf32>, vector<204x4xf32>, vector<2x4xf32> -> vector<2x4xf32>
    %13 = tpu.reciprocal %12 : vector<2x4xf32> -> vector<2x4xf32>
    %c0_9 = arith.constant 0 : index
    %c0_10 = arith.constant 0 : index
    %14 = vector.load %arg5[%c0_9, %c0_10] : memref<4x204xf32, #tpu.memory_space<vmem>>, vector<4x204xf32>
    %cst_11 = arith.constant dense<0.000000e+00> : vector<2x204xf32>
    %15 = tpu.matmul %13, %14, %cst_11 {dimension_numbers = #tpu.dot_dimension_numbers<[1], [0], [0], [1], [0, 0, 1, 1], [], []>} : vector<2x4xf32>, vector<4x204xf32>, vector<2x204xf32> -> vector<2x204xf32>
    %16 = arith.mulf %10, %15 : vector<2x204xf32>
    %c0_12 = arith.constant 0 : index
    %c0_13 = arith.constant 0 : index
    %17 = vector.load %arg6[%c0_12, %c0_13] : memref<2x204xf32, #tpu.memory_space<vmem>>, vector<2x204xf32>
    tpu.vector_store %arg6[%c0_12, %c0_13], %16 {strides = array<i32>} : memref<2x204xf32, #tpu.memory_space<vmem>>, vector<2x204xf32>,
    return
  }
  func.func @transform_0(%arg0: i32) -> (i32, i32) {
    %c0_i32 = arith.constant 0 : i32
    %c0_i32_0 = arith.constant 0 : i32
    return %arg0, %c0_i32 : i32, i32
  }
  func.func @transform_1(%arg0: i32) -> (i32, i32) {
    %c0_i32 = arith.constant 0 : i32
    %c0_i32_0 = arith.constant 0 : i32
    %c0_i32_1 = arith.constant 0 : i32
    return %c0_i32, %c0_i32_0 : i32, i32
  }
  func.func @transform_2(%arg0: i32) -> (i32, i32) {
    %c0_i32 = arith.constant 0 : i32
    %c0_i32_0 = arith.constant 0 : i32
    %c0_i32_1 = arith.constant 0 : i32
    return %c0_i32, %c0_i32_0 : i32, i32
  }
  func.func @transform_3(%arg0: i32) -> (i32, i32) {
    %c0_i32 = arith.constant 0 : i32
    %c0_i32_0 = arith.constant 0 : i32
    %c0_i32_1 = arith.constant 0 : i32
    return %c0_i32, %c0_i32_0 : i32, i32
  }
  func.func @transform_4(%arg0: i32) -> (i32, i32) {
    %c0_i32 = arith.constant 0 : i32
    %c0_i32_0 = arith.constant 0 : i32
    %c0_i32_1 = arith.constant 0 : i32
    return %c0_i32, %c0_i32_0 : i32, i32
  }
  func.func @transform_5(%arg0: i32) -> (i32, i32) {
    %c0_i32 = arith.constant 0 : i32
    %c0_i32_0 = arith.constant 0 : i32
    return %arg0, %c0_i32 : i32, i32
  }
}

</mosaic_0001>

<llo_original>
// kernel: tpu_custom_call.1
$region0: #{tpu_custom_call.1}
  #allocation0 [shape = 'u32[]', space=smem, size = 0x4, offset = 0x4, fixed_abs, tag = 'smem constant byte address 0x4 - core index']
  #allocation1 [shape = 'u32[144,128]{1,0:T(1,128)}', space=vmem, size = 0x12000, scoped, tag = 'internal scratch']
  %s0 = inlined_call_operand.vmem [shape: f32[2,32], index: 0, kind: input, shape index: {}]
  %s1 = inlined_call_operand.vmem [shape: f32[32,204], index: 1, kind: input, shape index: {}]
  %s2 = inlined_call_operand.vmem [shape: f32[1,204], index: 2, kind: input, shape index: {}]
  %s3 = inlined_call_operand.vmem [shape: f32[204,4], index: 3, kind: input, shape index: {}]
  %s4 = inlined_call_operand.vmem [shape: f32[4,204], index: 4, kind: input, shape index: {}]
  %s5 = inlined_call_operand.hbm [shape: f32[2,204], index: 5, kind: output, shape index: {}]
  %s6 = sld [smem:[#allocation0]]
  $region30: #{tpu_custom_call.1} parent=0
    _
  %s8 = ssub.s32 1, %s6
  %s9 = scalar_select 0, %s8, %s6
  $region1: #{tpu_custom_call.1} parent=0
    #allocation2 [shape = 'u8[2048]{0}', space=vmem, size = 0x800, scoped, tag = 'output window, operand 0, single buffered']
    #allocation3 [shape = 's32[1]{0}', space=sflag, size = 0x4, scoped, tag = 'scoped memory for tpu_custom_call.1']
    %10 = vsyncpa [#allocation3], 0
    // Predicated region
    $region2: #{tpu_custom_call.1} parent=1 // pred_check
      _
    $region3: #{tpu_custom_call.1} parent=1 // pred_check_branch
      %12 = sbr.rel (0) target = $region5
    $region4: #{tpu_custom_call.1} parent=1 // pred_region
      _
    $region5: #{tpu_custom_call.1} parent=1 // pred_fallthru
      _
    // Predicated region
    $region6: #{tpu_custom_call.1} parent=1 // pred_check
      _
    $region7: #{tpu_custom_call.1} parent=1 // pred_check_branch
      %14 = sbr.rel (0) target = $region9
    $region8: #{tpu_custom_call.1} parent=1 // pred_region
      _
    $region9: #{tpu_custom_call.1} parent=1 // pred_fallthru
      _
    // Predicated region
    $region10: #{tpu_custom_call.1} parent=1 // pred_check
      _
    $region11: #{tpu_custom_call.1} parent=1 // pred_check_branch
      %16 = sbr.rel (0) target = $region13
    $region12: #{tpu_custom_call.1} parent=1 // pred_region
      _
    $region13: #{tpu_custom_call.1} parent=1 // pred_fallthru
      _
    // Predicated region
    $region14: #{tpu_custom_call.1} parent=1 // pred_check
      _
    $region15: #{tpu_custom_call.1} parent=1 // pred_check_branch
      %18 = sbr.rel (0) target = $region17
    $region16: #{tpu_custom_call.1} parent=1 // pred_region
      _
    $region17: #{tpu_custom_call.1} parent=1 // pred_fallthru
      _
    // Predicated region
    $region18: #{tpu_custom_call.1} parent=1 // pred_check
      _
    $region19: #{tpu_custom_call.1} parent=1 // pred_check_branch
      %20 = sbr.rel (0) target = $region21
    $region20: #{tpu_custom_call.1} parent=1 // pred_region
      _
    $region21: #{tpu_custom_call.1} parent=1 // pred_fallthru
      _
    %v21 = vld [vmem:[%s0] sm:$0x3]
    %v22 = vld [vmem:[%s1] sm:$0xff]
    %v23 = vld [vmem:[%s1 + $0x8] sm:$0xff]
    %v24 = vld [vmem:[%s1 + $0x10] sm:$0xff]
    %v25 = vld [vmem:[%s1 + $0x18] sm:$0xff]
    %v26 = vld [vmem:[%s1 + $0x20] sm:$0xff]
    %v27 = vld [vmem:[%s1 + $0x28] sm:$0xff]
    %v28 = vld [vmem:[%s1 + $0x30] sm:$0xff]
    %v29 = vld [vmem:[%s1 + $0x38] sm:$0xff]
    %v30 = vld [vmem:[%s2] sm:$0x3]
    %v32 = vlaneseq
    %v33 = vshrl.u32 %v32, 7
    %v34 = vsub.s32 0, %v33
    %v35 = vrot.slane %v30, %v34
    %v36 = vlaneseq
    %v37 = vshrl.u32 %v36, 7
    %v38 = vsub.s32 1, %v37
    %v39 = vrot.slane %v30, %v38
    %vm42 = vcmask 261120
    %v44 = vsel %vm42, %v21, 0
    %46 = vmatprep.subr.mxu0 %v23
    %47 = vmatpush1.msra.mxu0 %v22
    %48 = vmatprep.subr.mxu0 %v25
    %49 = vmatpush1.msra.mxu0 %v24
    %50 = vmatprep.subr.mxu0 %v27
    %51 = vmatpush1.msra.mxu0 %v26
    %52 = vmatprep.subr.mxu0 %v29
    %53 = vmatpush1.msra.mxu0 %v28
    %54 = vmatprep.subr.mxu0 0.0
    %55 = vmatpush1.msra.mxu0 0.0
    %56 = vmatprep.subr.mxu0 0.0
    %57 = vmatpush1.msra.mxu0 0.0
    %58 = vmatprep.subr.mxu0 0.0
    %59 = vmatpush1.msra.mxu0 0.0
    %60 = vmatprep.subr.mxu0 0.0
    %61 = vmatpush1.msra.mxu0 0.0
    %62 = vmatprep.subr.mxu0 0.0
    %63 = vmatpush1.msra.mxu0 0.0
    %64 = vmatprep.subr.mxu0 0.0
    %65 = vmatpush1.msra.mxu0 0.0
    %66 = vmatprep.subr.mxu0 0.0
    %67 = vmatpush1.msra.mxu0 0.0
    %68 = vmatprep.subr.mxu0 0.0
    %69 = vmatpush1.msra.mxu0 0.0
    %70 = vmatprep.subr.mxu0 0.0
    %71 = vmatpush1.msra.mxu0 0.0
    %72 = vmatprep.subr.mxu0 0.0
    %73 = vmatpush1.msra.mxu0 0.0
    %74 = vmatprep.subr.mxu0 0.0
    %75 = vmatpush1.msra.mxu0 0.0
    %76 = vmatprep.subr.mxu0 0.0
    %77 = vmatpush1.msra.mxu0 0.0
    %78 = vmatprep.subr.mxu0 0.0
    %79 = vmatpush1.msra.mxu0 0.0
    %80 = vmatprep.subr.mxu0 0.0
    %81 = vmatpush1.msra.mxu0 0.0
    %82 = vmatprep.subr.mxu0 0.0
    %83 = vmatpush1.msra.mxu0 0.0
    %84 = vmatprep.subr.mxu0 0.0
    %85 = vmatpush1.msra.mxu0 0.0
    %86 = vmatprep.subr.mxu0 0.0
    %87 = vmatpush1.msra.mxu0 0.0
    %88 = vmatprep.subr.mxu0 0.0
    %89 = vmatpush1.msra.mxu0 0.0
    %90 = vmatprep.subr.mxu0 0.0
    %91 = vmatpush1.msra.mxu0 0.0
    %92 = vmatprep.subr.mxu0 0.0
    %93 = vmatpush1.msra.mxu0 0.0
    %94 = vmatprep.subr.mxu0 0.0
    %95 = vmatpush1.msra.mxu0 0.0
    %96 = vmatprep.subr.mxu0 0.0
    %97 = vmatpush1.msra.mxu0 0.0
    %98 = vmatprep.subr.mxu0 0.0
    %99 = vmatpush1.msra.mxu0 0.0
    %100 = vmatprep.subr.mxu0 0.0
    %101 = vmatpush1.msra.mxu0 0.0
    %102 = vmatprep.subr.mxu0 0.0
    %103 = vmatpush1.msra.mxu0 0.0
    %104 = vmatprep.subr.mxu0 0.0
    %105 = vmatpush1.msra.mxu0 0.0
    %106 = vmatprep.subr.mxu0 0.0
    %107 = vmatpush1.msra.mxu0 0.0
    %108 = vmatprep.subr.mxu0 0.0
    %109 = vmatpush1.msra.mxu0 0.0
    %110 = vmatprep.mubr.f32.mxu0 0.0
    %111 = vmatmul.mubr.f32.gmra.mrb[0].mxu0 %v44
    %v112 = vpop.f32.mrb[0].mxu0
    %v113 = vadd.f32 %v35, %v112
    %v114 = vpop.f32.mrb[0].mxu0
    %v115 = vadd.f32 %v39, %v114
    %116 = vdwg.mxu0
    %vm117 = vcmask 1041408
    %v118 = vsel %vm117, %v113, -inf
    %vm119 = vcmask 615424
    %v120 = vsel %vm119, %v115, -inf
    %v121 = vmax.f32 %v118, %v120
    %122 = vmax.xlane.f32.xlu0 %v121
    %v123 = vpop.xlane.xlu0 %122
    %v124 = vsub.f32 %v113, %v123
    %v125 = vsub.f32 %v115, %v123
    %v126 = vmul.f32 %v124, 1.442695
    %v127 = vpow.pop %v126
    %v128 = vmul.f32 %v125, 1.442695
    %v129 = vpow.pop %v128
    %v130 = vld [vmem:[%s3] sm:$0xff]
    %v131 = vld [vmem:[%s3 + $0x8] sm:$0xff]
    %v132 = vld [vmem:[%s3 + $0x10] sm:$0xff]
    %v133 = vld [vmem:[%s3 + $0x18] sm:$0xff]
    %v134 = vld [vmem:[%s3 + $0x20] sm:$0xff]
    %v135 = vld [vmem:[%s3 + $0x28] sm:$0xff]
    %v136 = vld [vmem:[%s3 + $0x30] sm:$0xff]
    %v137 = vld [vmem:[%s3 + $0x38] sm:$0xff]
    %v138 = vld [vmem:[%s3 + $0x40] sm:$0xff]
    %v139 = vld [vmem:[%s3 + $0x48] sm:$0xff]
    %v140 = vld [vmem:[%s3 + $0x50] sm:$0xff]
    %v141 = vld [vmem:[%s3 + $0x58] sm:$0xff]
    %v142 = vld [vmem:[%s3 + $0x60] sm:$0xff]
    %v143 = vld [vmem:[%s3 + $0x68] sm:$0xff]
    %v144 = vld [vmem:[%s3 + $0x70] sm:$0xff]
    %v145 = vld [vmem:[%s3 + $0x78] sm:$0xff]
    %v146 = vld [vmem:[%s3 + $0x80] sm:$0xff]
    %v147 = vld [vmem:[%s3 + $0x88] sm:$0xff]
    %v148 = vld [vmem:[%s3 + $0x90] sm:$0xff]
    %v149 = vld [vmem:[%s3 + $0x98] sm:$0xff]
    %v150 = vld [vmem:[%s3 + $0xa0] sm:$0xff]
    %v151 = vld [vmem:[%s3 + $0xa8] sm:$0xff]
    %v152 = vld [vmem:[%s3 + $0xb0] sm:$0xff]
    %v153 = vld [vmem:[%s3 + $0xb8] sm:$0xff]
    %v154 = vld [vmem:[%s3 + $0xc0] sm:$0xff]
    %v155 = vld [vmem:[%s3 + $0xc8] sm:$0xf]
    %vm156 = vcmask 621568
    %v158 = vsel %vm156, %v129, 0
    %vm160 = vcmask 1043456
    %v162 = vsel %vm160, %v155, 0
    %164 = vmatprep.subr.mxu0 0.0
    %165 = vmatpush1.msra.mxu0 %v130
    %166 = vmatprep.subr.mxu0 0.0
    %167 = vmatpush1.msra.mxu0 %v131
    %168 = vmatprep.subr.mxu0 0.0
    %169 = vmatpush1.msra.mxu0 %v132
    %170 = vmatprep.subr.mxu0 0.0
    %171 = vmatpush1.msra.mxu0 %v133
    %172 = vmatprep.subr.mxu0 0.0
    %173 = vmatpush1.msra.mxu0 %v134
    %174 = vmatprep.subr.mxu0 0.0
    %175 = vmatpush1.msra.mxu0 %v135
    %176 = vmatprep.subr.mxu0 0.0
    %177 = vmatpush1.msra.mxu0 %v136
    %178 = vmatprep.subr.mxu0 0.0
    %179 = vmatpush1.msra.mxu0 %v137
    %180 = vmatprep.subr.mxu0 0.0
    %181 = vmatpush1.msra.mxu0 %v138
    %182 = vmatprep.subr.mxu0 0.0
    %183 = vmatpush1.msra.mxu0 %v139
    %184 = vmatprep.subr.mxu0 0.0
    %185 = vmatpush1.msra.mxu0 %v140
    %186 = vmatprep.subr.mxu0 0.0
    %187 = vmatpush1.msra.mxu0 %v141
    %188 = vmatprep.subr.mxu0 0.0
    %189 = vmatpush1.msra.mxu0 %v142
    %190 = vmatprep.subr.mxu0 0.0
    %191 = vmatpush1.msra.mxu0 %v143
    %192 = vmatprep.subr.mxu0 0.0
    %193 = vmatpush1.msra.mxu0 %v144
    %194 = vmatprep.subr.mxu0 0.0
    %195 = vmatpush1.msra.mxu0 %v145
    %196 = vmatprep.subr.mxu0 0.0
    %197 = vmatpush1.msra.mxu0 %v146
    %198 = vmatprep.subr.mxu0 0.0
    %199 = vmatpush1.msra.mxu0 %v147
    %200 = vmatprep.subr.mxu0 0.0
    %201 = vmatpush1.msra.mxu0 %v148
    %202 = vmatprep.subr.mxu0 0.0
    %203 = vmatpush1.msra.mxu0 %v149
    %204 = vmatprep.subr.mxu0 0.0
    %205 = vmatpush1.msra.mxu0 %v150
    %206 = vmatprep.subr.mxu0 0.0
    %207 = vmatpush1.msra.mxu0 %v151
    %208 = vmatprep.subr.mxu0 0.0
    %209 = vmatpush1.msra.mxu0 %v152
    %210 = vmatprep.subr.mxu0 0.0
    %211 = vmatpush1.msra.mxu0 %v153
    %212 = vmatprep.subr.mxu0 0.0
    %213 = vmatpush1.msra.mxu0 %v154
    %214 = vmatprep.subr.mxu0 0.0
    %215 = vmatpush1.msra.mxu0 %v162
    %216 = vmatprep.subr.mxu0 0.0
    %217 = vmatpush1.msra.mxu0 0.0
    %218 = vmatprep.subr.mxu0 0.0
    %219 = vmatpush1.msra.mxu0 0.0
    %220 = vmatprep.subr.mxu0 0.0
    %221 = vmatpush1.msra.mxu0 0.0
    %222 = vmatprep.subr.mxu0 0.0
    %223 = vmatpush1.msra.mxu0 0.0
    %224 = vmatprep.subr.mxu0 0.0
    %225 = vmatpush1.msra.mxu0 0.0
    %226 = vmatprep.subr.mxu0 0.0
    %227 = vmatpush1.msra.mxu0 0.0
    %228 = vmatprep.mubr.f32.mxu0 %v158
    %229 = vmatmul.mubr.f32.gmra.mrb[0].mxu0 %v127
    %v230 = vpop.f32.mrb[0].mxu0
    %v231 = vadd.f32 0.0, %v230
    %v232 = vpop.f32.mrb[0].mxu0
    %233 = vdwg.mxu0
    %v234 = vrcp.pop %v231
    %v235 = vld [vmem:[%s4] sm:$0xff]
    %v237 = vcombine.high %v235, %v235
    %vm238 = vcmask 31744
    %v240 = vsel %vm238, %v234, 0
    %v242 = vsel %vm160, %v235, 0
    %v244 = vsel %vm160, %v237, 0
    %246 = vmatprep.subr.mxu0 %v244
    %247 = vmatpush1.msra.mxu0 %v242
    %248 = vmatprep.subr.mxu0 0.0
    %249 = vmatpush1.msra.mxu0 0.0
    %250 = vmatprep.subr.mxu0 0.0
    %251 = vmatpush1.msra.mxu0 0.0
    %252 = vmatprep.subr.mxu0 0.0
    %253 = vmatpush1.msra.mxu0 0.0
    %254 = vmatprep.subr.mxu0 0.0
    %255 = vmatpush1.msra.mxu0 0.0
    %256 = vmatprep.subr.mxu0 0.0
    %257 = vmatpush1.msra.mxu0 0.0
    %258 = vmatprep.subr.mxu0 0.0
    %259 = vmatpush1.msra.mxu0 0.0
    %260 = vmatprep.subr.mxu0 0.0
    %261 = vmatpush1.msra.mxu0 0.0
    %262 = vmatprep.subr.mxu0 0.0
    %263 = vmatpush1.msra.mxu0 0.0
    %264 = vmatprep.subr.mxu0 0.0
    %265 = vmatpush1.msra.mxu0 0.0
    %266 = vmatprep.subr.mxu0 0.0
    %267 = vmatpush1.msra.mxu0 0.0
    %268 = vmatprep.subr.mxu0 0.0
    %269 = vmatpush1.msra.mxu0 0.0
    %270 = vmatprep.subr.mxu0 0.0
    %271 = vmatpush1.msra.mxu0 0.0
    %272 = vmatprep.subr.mxu0 0.0
    %273 = vmatpush1.msra.mxu0 0.0
    %274 = vmatprep.subr.mxu0 0.0
    %275 = vmatpush1.msra.mxu0 0.0
    %276 = vmatprep.subr.mxu0 0.0
    %277 = vmatpush1.msra.mxu0 0.0
    %278 = vmatprep.subr.mxu0 0.0
    %279 = vmatpush1.msra.mxu0 0.0
    %280 = vmatprep.subr.mxu0 0.0
    %281 = vmatpush1.msra.mxu0 0.0
    %282 = vmatprep.subr.mxu0 0.0
    %283 = vmatpush1.msra.mxu0 0.0
    %284 = vmatprep.subr.mxu0 0.0
    %285 = vmatpush1.msra.mxu0 0.0
    %286 = vmatprep.subr.mxu0 0.0
    %287 = vmatpush1.msra.mxu0 0.0
    %288 = vmatprep.subr.mxu0 0.0
    %289 = vmatpush1.msra.mxu0 0.0
    %290 = vmatprep.subr.mxu0 0.0
    %291 = vmatpush1.msra.mxu0 0.0
    %292 = vmatprep.subr.mxu0 0.0
    %293 = vmatpush1.msra.mxu0 0.0
    %294 = vmatprep.subr.mxu0 0.0
    %295 = vmatpush1.msra.mxu0 0.0
    %296 = vmatprep.subr.mxu0 0.0
    %297 = vmatpush1.msra.mxu0 0.0
    %298 = vmatprep.subr.mxu0 0.0
    %299 = vmatpush1.msra.mxu0 0.0
    %300 = vmatprep.subr.mxu0 0.0
    %301 = vmatpush1.msra.mxu0 0.0
    %302 = vmatprep.subr.mxu0 0.0
    %303 = vmatpush1.msra.mxu0 0.0
    %304 = vmatprep.subr.mxu0 0.0
    %305 = vmatpush1.msra.mxu0 0.0
    %306 = vmatprep.subr.mxu0 0.0
    %307 = vmatpush1.msra.mxu0 0.0
    %308 = vmatprep.subr.mxu0 0.0
    %309 = vmatpush1.msra.mxu0 0.0
    %310 = vmatprep.mubr.f32.mxu0 0.0
    %311 = vmatmul.mubr.f32.gmra.mrb[0].mxu0 %v240
    %v312 = vpop.f32.mrb[0].mxu0
    %v313 = vadd.f32 0.0, %v312
    %v314 = vpop.f32.mrb[0].mxu0
    %v315 = vadd.f32 0.0, %v314
    %316 = vdwg.mxu0
    %v317 = vmul.f32 %v127, %v313
    %v318 = vmul.f32 %v129, %v315
    %v321 = vcombine.low %v317, %v318
    %v323 = vunpack.c.l.s4 1983009808
    %v324 = vunpack.c.0.s8 %v323
    %v325 = vlaneseq
    %v326 = vshrl.u32 %v325, 7
    %v327 = vsub.s32 %v324, %v326
    %v328 = vrot.slane %v321, %v327
    %vm330 = vcmask 617474
    %vm331 = vmor %vm330, %vm117
    %332 = vst.msk [vmem:[#allocation2] sm:$0xf] %vm331, %v328
    // Predicated region
    $region22: #{tpu_custom_call.1} parent=1 // pred_check
      _
    $region23: #{tpu_custom_call.1} parent=1 // pred_check_branch
      %334 = sbr.rel (0) target = $region25
    $region24: #{tpu_custom_call.1} parent=1 // pred_region
      %s336 = ssub.s32 64, 64
      %337 = vsyncadd [#allocation3], %s336
      %s339 = sshll.u32 [#allocation2], 4
      %s340 = int_to_ptr.vmem [resolvable:$true] %s339
      %342 = dma.vmem_to_hbm [thread:$0]  %s340, 64, %s5, [#allocation3]
    $region25: #{tpu_custom_call.1} parent=1 // pred_fallthru
      _
    // Predicated region
    $region26: #{tpu_custom_call.1} parent=1 // pred_check
      _
    $region27: #{tpu_custom_call.1} parent=1 // pred_check_branch
      %344 = sbr.rel (0) target = $region29
    $region28: #{tpu_custom_call.1} parent=1 // pred_region
      %345 = dma.done [#allocation3], 64
    $region29: #{tpu_custom_call.1} parent=1 // pred_fallthru
      _
    %346 = vsyncpa [#allocation3], 1

</llo_original>
